<compile_context>
chip_gen: v7x
topology: tpu7x:2x2x1
jax: 0.10.0
libtpu: 0.0.40
codegen_flags: <defaults>
</compile_context>

<pallas_src>
import functools
import numpy as np
import jax
import jax.numpy as jnp
from jax.experimental import pallas as pl
from jax.experimental.pallas import tpu as pltpu

FSIZE0 = 3
FSIZE1 = 2

_BN_EPS = 1e-4
# sigmoid(x) > 0.4  <=>  x > log(0.4 / 0.6)   (sigmoid is monotone)
_OCC_LOGIT_THRESH = float(np.log(0.4 / 0.6))


def _vmem_limit_bytes():
    try:
        cap = int(pltpu.get_tpu_info().vmem_capacity_bytes)
    except Exception:
        cap = 64 * 1024 * 1024
    # leave headroom: half of physical, capped at 64 MiB (v5e/v6e 128 MiB, v7x 64 MiB)
    return int(min(cap // 2, 64 * 1024 * 1024))


_VMEM_LIMIT = _vmem_limit_bytes()


# ----------------------------------------------------------------------------
# Pallas plumbing
# ----------------------------------------------------------------------------
def _fullspec(shape):
    nd = len(shape)
    return pl.BlockSpec(shape, lambda i, _nd=nd: (0,) * _nd)


def _call(kernel, ins, out_shapes):
    """Single-grid-step pallas_call with full-array blocks for every operand."""
    in_specs = [_fullspec(a.shape) for a in ins]
    if isinstance(out_shapes, (list, tuple)):
        out_specs = tuple(_fullspec(s.shape) for s in out_shapes)
        out_shape = tuple(out_shapes)
    else:
        out_specs = _fullspec(out_shapes.shape)
        out_shape = out_shapes
    return pl.pallas_call(
        kernel,
        grid=(1,),
        in_specs=in_specs,
        out_specs=out_specs,
        out_shape=out_shape,
        compiler_params=pltpu.CompilerParams(
            dimension_semantics=("arbitrary",),
            vmem_limit_bytes=_VMEM_LIMIT,
        ),
    )(*ins)


def _bn(x, gamma, beta, eps):
    # scn.BatchNormalization in training mode: biased batch statistics, f32 math.
    mean = jnp.mean(x, axis=0, keepdims=True)
    var = jnp.mean(jnp.square(x - mean), axis=0, keepdims=True)
    return (x - mean) * jax.lax.rsqrt(var + eps) * gamma + beta


# ----------------------------------------------------------------------------
# Fused Pallas kernels (all matmuls bf16 operands, f32 accumulation)
# ----------------------------------------------------------------------------
def _p1_q_kernel(g_ref, wp1_ref, wq_ref, x_ref, xq_ref):
    # p1 submanifold conv (as gathered matmul) + fused q 1x1 projection.
    x = jnp.dot(g_ref[...], wp1_ref[...], preferred_element_type=jnp.float32)
    x_ref[...] = x
    xq_ref[...] = jnp.dot(x.astype(jnp.bfloat16), wq_ref[...],
                          preferred_element_type=jnp.float32)


def _attention_kernel(g8_ref, wkv_ref, kvg_ref, kvb_ref, wproj_ref, q_ref, o_ref,
                      *, eps, nf):
    # strided kv conv -> BN -> merged [k|v] projection -> full softmax attention.
    # (the torch per-batch loop reassigns dk/dv to the FULL k/v tensors, and rows
    #  are batch-sorted, so concatenating the loop results == full attention)
    kv = jnp.dot(g8_ref[...], wkv_ref[...], preferred_element_type=jnp.float32)
    kv = _bn(kv, kvg_ref[...], kvb_ref[...], eps)
    kvp = jnp.dot(kv.astype(jnp.bfloat16), wproj_ref[...],
                  preferred_element_type=jnp.float32)
    xk = kvp[:, :nf].astype(jnp.bfloat16)
    xv = kvp[:, nf:].astype(jnp.bfloat16)
    # scores = q @ k^T, contracted directly (no materialized transpose); no 1/sqrt(d)
    s = jax.lax.dot_general(q_ref[...], xk, (((1,), (1,)), ((), ())),
                            preferred_element_type=jnp.float32)
    s = s - jnp.max(s, axis=-1, keepdims=True)
    p = jnp.exp(s)
    p = p * pl.reciprocal(jnp.sum(p, axis=-1, keepdims=True), approx=True)
    o_ref[...] = jnp.dot(p.astype(jnp.bfloat16), xv,
                         preferred_element_type=jnp.float32)


def _trans_res_kernel(g_ref, wt_ref, ang_ref, anb_ref, x_ref, r1g_ref, r1b_ref,
                      xf_ref, b1_ref, *, eps):
    # trans conv + after_norm BN + residual add, and the first BNReLU of the
    # res block fused in (its gathered output feeds the next conv).
    t = jnp.dot(g_ref[...], wt_ref[...], preferred_element_type=jnp.float32)
    xf = x_ref[...] + _bn(t, ang_ref[...], anb_ref[...], eps)
    xf_ref[...] = xf
    b1_ref[...] = jnp.maximum(_bn(xf, r1g_ref[...], r1b_ref[...], eps), 0.0)


def _conv_bnrelu_kernel(g_ref, w_ref, gg_ref, gb_ref, o_ref, *, eps):
    y = jnp.dot(g_ref[...], w_ref[...], preferred_element_type=jnp.float32)
    o_ref[...] = jnp.maximum(_bn(y, gg_ref[...], gb_ref[...], eps), 0.0)


def _conv_add_bnrelu_kernel(g_ref, w_ref, res_ref, gg_ref, gb_ref, o_ref, *, eps):
    y = res_ref[...] + jnp.dot(g_ref[...], w_ref[...],
                               preferred_element_type=jnp.float32)
    o_ref[...] = jnp.maximum(_bn(y, gg_ref[...], gb_ref[...], eps), 0.0)


def _head_kernel(g_ref, w_ref, gg_ref, gb_ref, wh_ref, bh_ref,
                 y_ref, out_ref, mask_ref, *, eps, thresh):
    # n1 conv + n2 BNReLU + merged [occ|sdf] linear heads + threshold mask.
    y = jnp.dot(g_ref[...], w_ref[...], preferred_element_type=jnp.float32)
    y = jnp.maximum(_bn(y, gg_ref[...], gb_ref[...], eps), 0.0)
    y_ref[...] = y
    heads = jnp.dot(y, wh_ref[...], preferred_element_type=jnp.float32) + bh_ref[...]
    out_ref[...] = heads
    mask_ref[...] = (heads[:, 0:1] > thresh).astype(jnp.float32)


# ---- wrappers ----------------------------------------------------------------
def fused_p1_q(g27, wp1, wq):
    n = g27.shape[0]
    nf = wp1.shape[1]
    return _call(_p1_q_kernel, [g27, wp1, wq],
                 (jax.ShapeDtypeStruct((n, nf), jnp.float32),
                  jax.ShapeDtypeStruct((n, nf), jnp.float32)))


def fused_attention(g8, wkv, kvg, kvb, wproj, q_bf16):
    n = q_bf16.shape[0]
    nf = wkv.shape[1]
    kern = functools.partial(_attention_kernel, eps=_BN_EPS, nf=nf)
    return _call(kern, [g8, wkv, kvg, kvb, wproj, q_bf16],
                 jax.ShapeDtypeStruct((n, nf), jnp.float32))


def fused_trans_res(g27, wt, ang, anb, x, r1g, r1b):
    n, nf = x.shape
    kern = functools.partial(_trans_res_kernel, eps=_BN_EPS)
    return _call(kern, [g27, wt, ang, anb, x, r1g, r1b],
                 (jax.ShapeDtypeStruct((n, nf), jnp.float32),
                  jax.ShapeDtypeStruct((n, nf), jnp.float32)))


def fused_conv_bnrelu(g27, w, gg, gb):
    n = g27.shape[0]
    nf = w.shape[1]
    kern = functools.partial(_conv_bnrelu_kernel, eps=_BN_EPS)
    return _call(kern, [g27, w, gg, gb], jax.ShapeDtypeStruct((n, nf), jnp.float32))


def fused_conv_add_bnrelu(g27, w, res, gg, gb):
    n, nf = res.shape
    kern = functools.partial(_conv_add_bnrelu_kernel, eps=_BN_EPS)
    return _call(kern, [g27, w, res, gg, gb],
                 jax.ShapeDtypeStruct((n, nf), jnp.float32))


def fused_head(g27, w, gg, gb, wh, bh):
    r = g27.shape[0]
    nf = w.shape[1]
    kern = functools.partial(_head_kernel, eps=_BN_EPS, thresh=_OCC_LOGIT_THRESH)
    return _call(kern, [g27, w, gg, gb, wh, bh],
                 (jax.ShapeDtypeStruct((r, nf), jnp.float32),
                  jax.ShapeDtypeStruct((r, 2), jnp.float32),
                  jax.ShapeDtypeStruct((r, 1), jnp.float32)))


# ----------------------------------------------------------------------------
# Sparse-conv rulebook construction (host-side, vectorized numpy)
# ----------------------------------------------------------------------------
_OFFS27 = np.array([(a - 1, b - 1, c - 1)
                    for a in range(FSIZE0) for b in range(FSIZE0)
                    for c in range(FSIZE0)], dtype=np.int64)
_OFFS8 = np.array([(a, b, c) for a in range(FSIZE1) for b in range(FSIZE1)
                   for c in range(FSIZE1)], dtype=np.int64)


def _keys(locs4, dims):
    # Injective scalar key over coordinate range [-1, dims[k]] per axis.
    l = locs4.astype(np.int64)
    d1, d2, d3 = dims[0] + 2, dims[1] + 2, dims[2] + 2
    return ((l[:, 3] * d1 + (l[:, 0] + 1)) * d2 + (l[:, 1] + 1)) * d3 + (l[:, 2] + 1)


def _lookup(site_locs, query_locs, dims):
    """Index of each query row inside site_locs, or len(site_locs) if absent."""
    n = site_locs.shape[0]
    skeys = _keys(site_locs, dims)
    order = np.argsort(skeys, kind="stable")
    sk = skeys[order]
    qkeys = _keys(query_locs, dims)
    pos = np.searchsorted(sk, qkeys)
    pos_c = np.minimum(pos, n - 1)
    found = sk[pos_c] == qkeys
    return np.where(found, order[pos_c], n).astype(np.int32)


def build_submanifold_table(locs, dims):
    # (N, 27) neighbor indices; value N means "missing neighbor" -> zero row.
    n = locs.shape[0]
    nb = locs[:, None, :3].astype(np.int64) + _OFFS27[None, :, :]
    q = np.concatenate(
        [nb, np.broadcast_to(locs[:, None, 3:4].astype(np.int64), (n, 27, 1))],
        axis=2)
    return _lookup(locs, q.reshape(-1, 4), dims).reshape(n, 27)


def build_strided_table(locs, dims):
    # scn.Convolution(filter=2, stride=2): output sites = unique(in // 2).
    out_locs = np.unique(
        np.concatenate([locs[:, :3] // 2, locs[:, 3:4]], axis=1), axis=0)
    m = out_locs.shape[0]
    base = out_locs[:, None, :3].astype(np.int64) * 2 + _OFFS8[None, :, :]
    q = np.concatenate(
        [base, np.broadcast_to(out_locs[:, None, 3:4].astype(np.int64), (m, 8, 1))],
        axis=2)
    return out_locs, _lookup(locs, q.reshape(-1, 4), dims).reshape(m, 8)


def gather_rows(feats, idx):
    """feats (N, C) f32; idx (R, K) int32 with value N meaning zero row.
    Returns the gathered (R, K*C) matrix cast to bf16 (MXU operand)."""
    feats = jnp.asarray(feats, jnp.float32)
    n, c = feats.shape
    fp = jnp.concatenate([feats, jnp.zeros((1, c), feats.dtype)], axis=0)
    g = jnp.take(fp, jnp.asarray(idx), axis=0)
    r, k = idx.shape
    return g.reshape(r, k * c).astype(jnp.bfloat16)


def concat_skip(locs_from, feats_from, locs_to, feats_to, spatial_size, batch_size):
    if len(locs_from) == 0 or len(locs_to) == 0:
        return jnp.asarray(feats_to, jnp.float32)

    def key(L):
        L = L.astype(np.int64)
        return (L[:, 0] * spatial_size[1] * spatial_size[2]
                + L[:, 1] * spatial_size[2] + L[:, 2]) * batch_size + L[:, 3]

    kf, kt = key(locs_from), key(locs_to)
    total = spatial_size[0] * spatial_size[1] * spatial_size[2] * batch_size
    ind_from = np.zeros(total, np.int64)
    ind_to = np.zeros(total, np.int64)
    ind_from[kf] = np.arange(len(kf)) + 1
    ind_to[kt] = np.arange(len(kt)) + 1
    inds = np.nonzero((ind_from > 0) & (ind_to > 0))[0]
    feats_from = jnp.asarray(feats_from, jnp.float32)
    feats_to = jnp.asarray(feats_to, jnp.float32)
    aligned = jnp.zeros((feats_to.shape[0], feats_from.shape[1]), jnp.float32)
    if inds.shape[0] > 0:
        aligned = aligned.at[jnp.asarray(ind_to[inds] - 1)].set(
            feats_from[jnp.asarray(ind_from[inds] - 1)])
    return jnp.concatenate([feats_to, aligned], axis=1)


def to_next_level_locs(locs_np):
    # offsets = torch.nonzero(ones(2,2,2)) -> lexicographic {0,1}^3
    n = locs_np.shape[0]
    locs_next = np.repeat(locs_np[:, None, :], 8, axis=1).copy()
    locs_next[:, :, :3] = locs_next[:, :, :3] * 2 + _OFFS8[None, :, :]
    return locs_next.reshape(n * 8, 4)


# ----------------------------------------------------------------------------
# SelfTransformerLayer / Refinement forward
# ----------------------------------------------------------------------------
def self_transformer_forward(p, locs_np, feats, dims):
    # p0 InputLayer(mode=0): identity on unique, batch-sorted locations.
    idx27 = build_submanifold_table(locs_np, dims)
    _, idx8 = build_strided_table(locs_np, dims)

    # p1 conv + q projection (fused)
    x, xq = fused_p1_q(gather_rows(feats, idx27), p["p1"], p["q"])
    # strided kv conv + BN + [k|v] projection + full softmax attention (fused)
    x_r = fused_attention(gather_rows(x, idx8), p["kv_w"], p["kv_bn_g"],
                          p["kv_bn_b"], p["kv_proj"], xq.astype(jnp.bfloat16))
    # trans conv + after_norm + residual add + res-block BNReLU #1 (fused)
    x_feats, b1 = fused_trans_res(gather_rows(x_r, idx27), p["trans"],
                                  p["an_g"], p["an_b"], x,
                                  p["r_bn1_g"], p["r_bn1_b"])
    # res conv1 + BNReLU #2 (fused)
    b2 = fused_conv_bnrelu(gather_rows(b1, idx27), p["r_conv1"],
                           p["r_bn2_g"], p["r_bn2_b"])
    # res conv2 + residual add + BNReLU #3 (fused)
    return fused_conv_add_bnrelu(gather_rows(b2, idx27), p["r_conv2"],
                                 x_feats, p["r_bn3_g"], p["r_bn3_b"])


def refinement_forward(params, x, h):
    # x = [ [[skip_locs, skip_feats], spatial_size], [input_locs, input_feats],
    #       batch_size ]    (max_data_size[0] == 32 path)
    input_locs = np.asarray(x[1][0])
    if len(input_locs) == 0:
        return ([[], []], [[], []])
    skip_locs = np.asarray(x[0][0][0])
    skip_feats = x[0][0][1]
    spatial_size = x[0][1]
    batch_size = x[2]

    feats_cat = concat_skip(skip_locs, skip_feats, input_locs, x[1][1],
                            spatial_size, batch_size)
    x_feats = self_transformer_forward(params["st"], input_locs, feats_cat,
                                       spatial_size)

    # next-level expansion: child row r has features of parent r // 8, so remap
    # the child-site neighbor table to parent rows instead of materializing the
    # 8x-repeated feature matrix.
    locs_unfilt = to_next_level_locs(input_locs)
    r_total = locs_unfilt.shape[0]
    n_parent = x_feats.shape[0]
    idx27_next = build_submanifold_table(locs_unfilt, spatial_size)
    parent_idx = np.where(idx27_next < r_total, idx27_next // 8,
                          n_parent).astype(np.int32)

    # n1 conv + n2 BNReLU + merged [occ|sdf] heads + threshold (fused)
    y, out2, maskf = fused_head(gather_rows(x_feats, parent_idx), params["n1"],
                                params["n2_g"], params["n2_b"],
                                params["head_w"], params["head_b"])

    # dynamic-shape compaction (unavoidable single host sync)
    keep = np.nonzero(np.asarray(maskf).reshape(-1) > 0.5)[0]
    keep_dev = jnp.asarray(keep.astype(np.int32))
    locs = jnp.asarray(locs_unfilt[keep].astype(np.int32))
    feats_all = jnp.concatenate([y, out2], axis=1)     # pass_feats and pass_occ
    feats_out = jnp.take(feats_all, keep_dev, axis=0)
    return ([locs, feats_out], [jnp.asarray(locs_unfilt.astype(np.int32)), out2])


# ----------------------------------------------------------------------------
# Deterministic parameter init (weights pre-reshaped / merged / bf16-cast)
# ----------------------------------------------------------------------------
def init_params(key, nf_in, nf):
    keys = iter(jax.random.split(key, 48))

    def w(shape, scale=0.1, dtype=jnp.bfloat16):
        return (scale * jax.random.normal(next(keys), shape, jnp.float32)).astype(dtype)

    def bn():
        g = 1.0 + 0.05 * jax.random.normal(next(keys), (1, nf), jnp.float32)
        b = 0.05 * jax.random.normal(next(keys), (1, nf), jnp.float32)
        return g, b

    st = {}
    st["p1"] = w((27 * nf_in, nf))
    st["q"] = w((nf, nf))
    st["kv_proj"] = w((nf, 2 * nf))            # merged [k | v] projection
    st["kv_w"] = w((8 * nf, nf))
    st["kv_bn_g"], st["kv_bn_b"] = bn()
    st["trans"] = w((27 * nf, nf))
    st["an_g"], st["an_b"] = bn()
    st["r_bn1_g"], st["r_bn1_b"] = bn()
    st["r_conv1"] = w((27 * nf, nf))
    st["r_bn2_g"], st["r_bn2_b"] = bn()
    st["r_conv2"] = w((27 * nf, nf))
    st["r_bn3_g"], st["r_bn3_b"] = bn()

    params = {"st": st}
    params["n1"] = w((27 * nf, nf))
    params["n2_g"], params["n2_b"] = bn()
    params["head_w"] = w((nf, 2), dtype=jnp.float32)   # merged [occ | sdf] heads
    params["head_b"] = w((1, 2), dtype=jnp.float32)
    return params


# ----------------------------------------------------------------------------
if __name__ == "__main__":
    key = jax.random.PRNGKey(0)
    k_loc, k_feat, k_skip, k_par = jax.random.split(key, 4)

    batch_size = 2
    max_data_size = [32, 32, 32]
    nf_in, nf = 8, 8          # Refinement(nf_in=8, nf=8, pass_occ=True, pass_feats=True)
    c_to, c_from = 4, 4       # concat_skip -> nf_in channels

    # active voxel locations (x, y, z, batch), coords in [0,16) so children fit 32^3,
    # sorted by batch id (scn InputLayer ordering convention).
    locs_list = []
    for b in range(batch_size):
        kk = jax.random.fold_in(k_loc, b)
        coords = np.asarray(jax.random.randint(kk, (12, 3), 0, 16))
        coords = np.unique(coords, axis=0)
        locs_list.append(
            np.concatenate([coords, np.full((coords.shape[0], 1), b)], axis=1))
    input_locs = np.concatenate(locs_list, axis=0).astype(np.int64)
    N = input_locs.shape[0]
    input_feats = jax.random.normal(k_feat, (N, c_to), jnp.float32)

    # skip tensor: half of the input sites plus a couple of extras
    skip_locs = np.unique(
        np.concatenate([input_locs[::2],
                        np.array([[1, 2, 3, 0], [5, 6, 7, 1]], np.int64)], axis=0),
        axis=0)
    skip_feats = jax.random.normal(k_skip, (skip_locs.shape[0], c_from), jnp.float32)

    params = init_params(k_par, nf_in, nf)

    x = [[[skip_locs, skip_feats], max_data_size],
         [input_locs, input_feats],
         batch_size]

    (locs_out, feats_out), (locs_unfilt, occ_sdf) = refinement_forward(params, x, h=0)

    jax.block_until_ready(occ_sdf)
    jax.block_until_ready(feats_out)

    assert occ_sdf.shape == (N * 8, 2)
    assert locs_unfilt.shape == (N * 8, 4)
    assert feats_out.shape[1] == nf + 2
    print("KERNEL_OK")
</pallas_src>

<mosaic_0001>
module attributes {stable_mosaic.version = 11 : i64} {
  func.func @_p1_q_kernel(%arg0: i32, %arg1: memref<24x216xbf16, #tpu.memory_space<vmem>>, %arg2: memref<216x8xbf16, #tpu.memory_space<vmem>>, %arg3: memref<8x8xbf16, #tpu.memory_space<vmem>>, %arg4: memref<24x8xf32, #tpu.memory_space<vmem>>, %arg5: memref<24x8xf32, #tpu.memory_space<vmem>>) attributes {dimension_semantics = [#tpu.dimension_semantics<arbitrary>], iteration_bounds = array<i64: 1>, scalar_prefetch = 0 : i64, scratch_operands = 0 : i64, tpu.core_type = #tpu.core_type<tc>, window_params = [{pipeline_mode = #tpu.pipeline_mode<synchronous>, transform_indices = @transform_0, window_bounds = array<i64: 24, 216>}, {pipeline_mode = #tpu.pipeline_mode<synchronous>, transform_indices = @transform_1, window_bounds = array<i64: 216, 8>}, {pipeline_mode = #tpu.pipeline_mode<synchronous>, transform_indices = @transform_2, window_bounds = array<i64: 8, 8>}, {pipeline_mode = #tpu.pipeline_mode<synchronous>, transform_indices = @transform_3, window_bounds = array<i64: 24, 8>}, {pipeline_mode = #tpu.pipeline_mode<synchronous>, transform_indices = @transform_4, window_bounds = array<i64: 24, 8>}]} {
    %c0 = arith.constant 0 : index
    %c0_0 = arith.constant 0 : index
    %0 = vector.load %arg1[%c0, %c0_0] : memref<24x216xbf16, #tpu.memory_space<vmem>>, vector<24x216xbf16>
    %c0_1 = arith.constant 0 : index
    %c0_2 = arith.constant 0 : index
    %1 = vector.load %arg2[%c0_1, %c0_2] : memref<216x8xbf16, #tpu.memory_space<vmem>>, vector<216x8xbf16>
    %cst = arith.constant dense<0.000000e+00> : vector<24x8xf32>
    %2 = tpu.matmul %0, %1, %cst {dimension_numbers = #tpu.dot_dimension_numbers<[1], [0], [0], [1], [0, 0, 1, 1], [], []>} : vector<24x216xbf16>, vector<216x8xbf16>, vector<24x8xf32> -> vector<24x8xf32>
    %c0_3 = arith.constant 0 : index
    %c0_4 = arith.constant 0 : index
    %3 = vector.load %arg4[%c0_3, %c0_4] : memref<24x8xf32, #tpu.memory_space<vmem>>, vector<24x8xf32>
    tpu.vector_store %arg4[%c0_3, %c0_4], %2 {strides = array<i32>} : memref<24x8xf32, #tpu.memory_space<vmem>>, vector<24x8xf32>,
    %4 = arith.truncf %2 : vector<24x8xf32> to vector<24x8xbf16>
    %c0_5 = arith.constant 0 : index
    %c0_6 = arith.constant 0 : index
    %5 = vector.load %arg3[%c0_5, %c0_6] : memref<8x8xbf16, #tpu.memory_space<vmem>>, vector<8x8xbf16>
    %cst_7 = arith.constant dense<0.000000e+00> : vector<24x8xf32>
    %6 = tpu.matmul %4, %5, %cst_7 {dimension_numbers = #tpu.dot_dimension_numbers<[1], [0], [0], [1], [0, 0, 1, 1], [], []>} : vector<24x8xbf16>, vector<8x8xbf16>, vector<24x8xf32> -> vector<24x8xf32>
    %c0_8 = arith.constant 0 : index
    %c0_9 = arith.constant 0 : index
    %7 = vector.load %arg5[%c0_8, %c0_9] : memref<24x8xf32, #tpu.memory_space<vmem>>, vector<24x8xf32>
    tpu.vector_store %arg5[%c0_8, %c0_9], %6 {strides = array<i32>} : memref<24x8xf32, #tpu.memory_space<vmem>>, vector<24x8xf32>,
    return
  }
  func.func @transform_0(%arg0: i32) -> (i32, i32) {
    %c0_i32 = arith.constant 0 : i32
    %c0_i32_0 = arith.constant 0 : i32
    %c0_i32_1 = arith.constant 0 : i32
    return %c0_i32, %c0_i32_0 : i32, i32
  }
  func.func @transform_1(%arg0: i32) -> (i32, i32) {
    %c0_i32 = arith.constant 0 : i32
    %c0_i32_0 = arith.constant 0 : i32
    %c0_i32_1 = arith.constant 0 : i32
    return %c0_i32, %c0_i32_0 : i32, i32
  }
  func.func @transform_2(%arg0: i32) -> (i32, i32) {
    %c0_i32 = arith.constant 0 : i32
    %c0_i32_0 = arith.constant 0 : i32
    %c0_i32_1 = arith.constant 0 : i32
    return %c0_i32, %c0_i32_0 : i32, i32
  }
  func.func @transform_3(%arg0: i32) -> (i32, i32) {
    %c0_i32 = arith.constant 0 : i32
    %c0_i32_0 = arith.constant 0 : i32
    %c0_i32_1 = arith.constant 0 : i32
    return %c0_i32, %c0_i32_0 : i32, i32
  }
  func.func @transform_4(%arg0: i32) -> (i32, i32) {
    %c0_i32 = arith.constant 0 : i32
    %c0_i32_0 = arith.constant 0 : i32
    %c0_i32_1 = arith.constant 0 : i32
    return %c0_i32, %c0_i32_0 : i32, i32
  }
}

</mosaic_0001>

<llo_original>
// kernel: tpu_custom_call.1
$region0: #{tpu_custom_call.1}
  #allocation0 [shape = 'u32[]', space=smem, size = 0x4, offset = 0x4, fixed_abs, tag = 'smem constant byte address 0x4 - core index']
  #allocation1 [shape = 'u32[144,128]{1,0:T(1,128)}', space=vmem, size = 0x12000, scoped, tag = 'internal scratch']
  %s0 = inlined_call_operand.vmem [shape: bf16[24,216], index: 0, kind: input, shape index: {}]
  %s1 = inlined_call_operand.vmem [shape: bf16[216,8], index: 1, kind: input, shape index: {}]
  %s2 = inlined_call_operand.vmem [shape: bf16[8,8], index: 2, kind: input, shape index: {}]
  %s3 = inlined_call_operand.vmem [shape: f32[24,8], index: 3, kind: output, shape index: {0}]
  %s4 = inlined_call_operand.vmem [shape: f32[24,8], index: 4, kind: output, shape index: {1}]
  %5 = xla_tuple %s3, %s4
  %s6 = sld [smem:[#allocation0]]
  $region30: #{tpu_custom_call.1} parent=0
    _
  %s8 = ssub.s32 1, %s6
  %s9 = scalar_select 0, %s8, %s6
  // Predicated region
  $region2: #{tpu_custom_call.1} parent=0 // pred_check
    _
  $region3: #{tpu_custom_call.1} parent=0 // pred_check_branch
    %11 = sbr.rel (0) target = $region5
  $region4: #{tpu_custom_call.1} parent=0 // pred_region
    _
  $region5: #{tpu_custom_call.1} parent=0 // pred_fallthru
    _
  // Predicated region
  $region6: #{tpu_custom_call.1} parent=0 // pred_check
    _
  $region7: #{tpu_custom_call.1} parent=0 // pred_check_branch
    %13 = sbr.rel (0) target = $region9
  $region8: #{tpu_custom_call.1} parent=0 // pred_region
    _
  $region9: #{tpu_custom_call.1} parent=0 // pred_fallthru
    _
  // Predicated region
  $region10: #{tpu_custom_call.1} parent=0 // pred_check
    _
  $region11: #{tpu_custom_call.1} parent=0 // pred_check_branch
    %15 = sbr.rel (0) target = $region13
  $region12: #{tpu_custom_call.1} parent=0 // pred_region
    _
  $region13: #{tpu_custom_call.1} parent=0 // pred_fallthru
    _
  %v17 = vld [vmem:[%s0] sm:$0xff]
  %v18 = vld [vmem:[%s0 + $0x8] sm:$0xff]
  %v19 = vld [vmem:[%s0 + $0x10] sm:$0xff]
  %v20 = vld [vmem:[%s1] sm:$0xf]
  %v21 = vld [vmem:[%s1 + $0x4] sm:$0xf]
  %v22 = vld [vmem:[%s1 + $0x8] sm:$0xf]
  %v23 = vld [vmem:[%s1 + $0xc] sm:$0xf]
  %v24 = vld [vmem:[%s1 + $0x10] sm:$0xf]
  %v25 = vld [vmem:[%s1 + $0x14] sm:$0xf]
  %v26 = vld [vmem:[%s1 + $0x18] sm:$0xf]
  %v27 = vld [vmem:[%s1 + $0x1c] sm:$0xf]
  %v28 = vld [vmem:[%s1 + $0x20] sm:$0xf]
  %v29 = vld [vmem:[%s1 + $0x24] sm:$0xf]
  %v30 = vld [vmem:[%s1 + $0x28] sm:$0xf]
  %v31 = vld [vmem:[%s1 + $0x2c] sm:$0xf]
  %v32 = vld [vmem:[%s1 + $0x30] sm:$0xf]
  %v33 = vld [vmem:[%s1 + $0x34] sm:$0xf]
  %v34 = vld [vmem:[%s1 + $0x38] sm:$0xf]
  %v35 = vld [vmem:[%s1 + $0x3c] sm:$0xf]
  %v36 = vld [vmem:[%s1 + $0x40] sm:$0xf]
  %v37 = vld [vmem:[%s1 + $0x44] sm:$0xf]
  %v38 = vld [vmem:[%s1 + $0x48] sm:$0xf]
  %v39 = vld [vmem:[%s1 + $0x4c] sm:$0xf]
  %v40 = vld [vmem:[%s1 + $0x50] sm:$0xf]
  %v41 = vld [vmem:[%s1 + $0x54] sm:$0xf]
  %v42 = vld [vmem:[%s1 + $0x58] sm:$0xf]
  %v43 = vld [vmem:[%s1 + $0x5c] sm:$0xf]
  %v44 = vld [vmem:[%s1 + $0x60] sm:$0xf]
  %v45 = vld [vmem:[%s1 + $0x64] sm:$0xf]
  %v46 = vld [vmem:[%s1 + $0x68] sm:$0xf]
  %v50 = vunpack.c.l.b16 %v17
  %v51 = vunpack.c.h.b16 %v17
  %v52 = vunpack.c.l.b16 %v18
  %v53 = vunpack.c.h.b16 %v18
  %v54 = vunpack.c.l.b16 %v19
  %v55 = vunpack.c.h.b16 %v19
  %v56 = vpack.c.b16 %v52, %v50
  %v57 = vpack.c.b16 %v53, %v51
  %v58 = vpack.c.b16 %v54, %v54
  %v59 = vpack.c.b16 %v55, %v55
  %v89 = vunpack.c.l.b16 %v20
  %v90 = vunpack.c.l.b16 %v21
  %v91 = vunpack.c.l.b16 %v22
  %v92 = vunpack.c.l.b16 %v23
  %v93 = vunpack.c.l.b16 %v24
  %v94 = vunpack.c.l.b16 %v25
  %v95 = vunpack.c.l.b16 %v26
  %v96 = vunpack.c.l.b16 %v27
  %v97 = vunpack.c.l.b16 %v28
  %v98 = vunpack.c.l.b16 %v29
  %v99 = vunpack.c.l.b16 %v30
  %v100 = vunpack.c.l.b16 %v31
  %v101 = vunpack.c.l.b16 %v32
  %v102 = vunpack.c.l.b16 %v33
  %v103 = vunpack.c.l.b16 %v34
  %v104 = vunpack.c.l.b16 %v35
  %v105 = vunpack.c.l.b16 %v36
  %v106 = vunpack.c.l.b16 %v37
  %v107 = vunpack.c.l.b16 %v38
  %v108 = vunpack.c.l.b16 %v39
  %v109 = vunpack.c.l.b16 %v40
  %v110 = vunpack.c.l.b16 %v41
  %v111 = vunpack.c.l.b16 %v42
  %v112 = vunpack.c.l.b16 %v43
  %v113 = vunpack.c.l.b16 %v44
  %v114 = vunpack.c.l.b16 %v45
  %v115 = vunpack.c.l.b16 %v46
  %v116 = vpack.c.b16 %v90, %v89
  %v117 = vpack.c.b16 %v92, %v91
  %v118 = vpack.c.b16 %v94, %v93
  %v119 = vpack.c.b16 %v96, %v95
  %v120 = vpack.c.b16 %v98, %v97
  %v121 = vpack.c.b16 %v100, %v99
  %v122 = vpack.c.b16 %v102, %v101
  %v123 = vpack.c.b16 %v104, %v103
  %v124 = vpack.c.b16 %v106, %v105
  %v125 = vpack.c.b16 %v108, %v107
  %v126 = vpack.c.b16 %v110, %v109
  %v127 = vpack.c.b16 %v112, %v111
  %v128 = vpack.c.b16 %v114, %v113
  %v129 = vpack.c.b16 %v115, %v115
  %vm143 = vcmask 719872
  %v145 = vsel %vm143, %v57, 0
  %v148 = vsel %vm143, %v59, 0
  %vm150 = vcmask 1043456
  %v152 = vsel %vm150, %v129, 0
  %154 = vmatprep.subr.bf16.mxu0 0
  %155 = vmatpush1.bf16.msra.mxu0 %v116
  %156 = vmatprep.subr.bf16.mxu0 0
  %157 = vmatpush1.bf16.msra.mxu0 %v117
  %158 = vmatprep.subr.bf16.mxu0 0
  %159 = vmatpush1.bf16.msra.mxu0 %v118
  %160 = vmatprep.subr.bf16.mxu0 0
  %161 = vmatpush1.bf16.msra.mxu0 %v119
  %162 = vmatprep.subr.bf16.mxu0 0
  %163 = vmatpush1.bf16.msra.mxu0 %v120
  %164 = vmatprep.subr.bf16.mxu0 0
  %165 = vmatpush1.bf16.msra.mxu0 %v121
  %166 = vmatprep.subr.bf16.mxu0 0
  %167 = vmatpush1.bf16.msra.mxu0 %v122
  %168 = vmatprep.subr.bf16.mxu0 0
  %169 = vmatpush1.bf16.msra.mxu0 %v123
  %170 = vmatprep.subr.bf16.mxu0 0
  %171 = vmatpush1.bf16.msra.mxu0 %v124
  %172 = vmatprep.subr.bf16.mxu0 0
  %173 = vmatpush1.bf16.msra.mxu0 %v125
  %174 = vmatprep.subr.bf16.mxu0 0
  %175 = vmatpush1.bf16.msra.mxu0 %v126
  %176 = vmatprep.subr.bf16.mxu0 0
  %177 = vmatpush1.bf16.msra.mxu0 %v127
  %178 = vmatprep.subr.bf16.mxu0 0
  %179 = vmatpush1.bf16.msra.mxu0 %v128
  %180 = vmatprep.subr.bf16.mxu0 0
  %181 = vmatpush1.bf16.msra.mxu0 %v152
  %182 = vmatprep.subr.bf16.mxu0 0
  %183 = vmatpush1.bf16.msra.mxu0 0
  %184 = vmatprep.subr.bf16.mxu0 0
  %185 = vmatpush1.bf16.msra.mxu0 0
  %186 = vmatprep.mubr.bf16.mxu0 %v145
  %187 = vmatmul.mubr.bf16.gmra.mrb[0].mxu0 %v56
  %v188 = vpop.f32.mrb[0].mxu0
  %v189 = vadd.f32 0.0, %v188
  %v190 = vpop.f32.mrb[0].mxu0
  %v191 = vpop.f32.mrb[0].mxu0
  %v192 = vadd.f32 0.0, %v191
  %v193 = vpop.f32.mrb[0].mxu0
  %194 = vmatprep.mubr.bf16.mxu0 %v148
  %195 = vmatmul.mubr.bf16.gmra.mrb[0].mxu0 %v58
  %v196 = vpop.f32.mrb[0].mxu0
  %v197 = vadd.f32 0.0, %v196
  %v198 = vpop.f32.mrb[0].mxu0
  %v199 = vpop.f32.mrb[0].mxu0
  %v200 = vpop.f32.mrb[0].mxu0
  %201 = vdwg.mxu0
  %vm202 = vcmask 64512
  %203 = vst.msk [vmem:[%s3] sm:$0xff] %vm202, %v189
  %204 = vst.msk [vmem:[%s3 + $0x8] sm:$0xff] %vm202, %v192
  %205 = vst.msk [vmem:[%s3 + $0x10] sm:$0xff] %vm202, %v197
  %v206 = vpack.c.bf16 %v192, %v189
  %v207 = vpack.c.bf16 %v197, %v197
  %v208 = vld [vmem:[%s2] sm:$0xf]
  %v210 = vsel %vm202, %v206, 0
  %v213 = vsel %vm202, %v207, 0
  %v216 = vsel %vm150, %v208, 0
  %218 = vmatprep.subr.bf16.mxu0 0
  %219 = vmatpush1.bf16.msra.mxu0 %v216
  %220 = vmatprep.subr.bf16.mxu0 0
  %221 = vmatpush1.bf16.msra.mxu0 0
  %222 = vmatprep.subr.bf16.mxu0 0
  %223 = vmatpush1.bf16.msra.mxu0 0
  %224 = vmatprep.subr.bf16.mxu0 0
  %225 = vmatpush1.bf16.msra.mxu0 0
  %226 = vmatprep.subr.bf16.mxu0 0
  %227 = vmatpush1.bf16.msra.mxu0 0
  %228 = vmatprep.subr.bf16.mxu0 0
  %229 = vmatpush1.bf16.msra.mxu0 0
  %230 = vmatprep.subr.bf16.mxu0 0
  %231 = vmatpush1.bf16.msra.mxu0 0
  %232 = vmatprep.subr.bf16.mxu0 0
  %233 = vmatpush1.bf16.msra.mxu0 0
  %234 = vmatprep.subr.bf16.mxu0 0
  %235 = vmatpush1.bf16.msra.mxu0 0
  %236 = vmatprep.subr.bf16.mxu0 0
  %237 = vmatpush1.bf16.msra.mxu0 0
  %238 = vmatprep.subr.bf16.mxu0 0
  %239 = vmatpush1.bf16.msra.mxu0 0
  %240 = vmatprep.subr.bf16.mxu0 0
  %241 = vmatpush1.bf16.msra.mxu0 0
  %242 = vmatprep.subr.bf16.mxu0 0
  %243 = vmatpush1.bf16.msra.mxu0 0
  %244 = vmatprep.subr.bf16.mxu0 0
  %245 = vmatpush1.bf16.msra.mxu0 0
  %246 = vmatprep.subr.bf16.mxu0 0
  %247 = vmatpush1.bf16.msra.mxu0 0
  %248 = vmatprep.subr.bf16.mxu0 0
  %249 = vmatpush1.bf16.msra.mxu0 0
  %250 = vmatprep.mubr.bf16.mxu0 0
  %251 = vmatmul.mubr.bf16.gmra.mrb[0].mxu0 %v210
  %v252 = vpop.f32.mrb[0].mxu0
  %v253 = vadd.f32 0.0, %v252
  %v254 = vpop.f32.mrb[0].mxu0
  %v255 = vpop.f32.mrb[0].mxu0
  %v256 = vadd.f32 0.0, %v255
  %v257 = vpop.f32.mrb[0].mxu0
  %258 = vmatprep.mubr.bf16.mxu0 0
  %259 = vmatmul.mubr.bf16.gmra.mrb[0].mxu0 %v213
  %v260 = vpop.f32.mrb[0].mxu0
  %v261 = vadd.f32 0.0, %v260
  %v262 = vpop.f32.mrb[0].mxu0
  %v263 = vpop.f32.mrb[0].mxu0
  %v264 = vpop.f32.mrb[0].mxu0
  %265 = vdwg.mxu0
  %266 = vst.msk [vmem:[%s4] sm:$0xff] %vm202, %v253
  %267 = vst.msk [vmem:[%s4 + $0x8] sm:$0xff] %vm202, %v256
  %268 = vst.msk [vmem:[%s4 + $0x10] sm:$0xff] %vm202, %v261
  // Predicated region
  $region14: #{tpu_custom_call.1} parent=0 // pred_check
    _
  $region15: #{tpu_custom_call.1} parent=0 // pred_check_branch
    %270 = sbr.rel (0) target = $region17
  $region16: #{tpu_custom_call.1} parent=0 // pred_region
    _
  $region17: #{tpu_custom_call.1} parent=0 // pred_fallthru
    _
  // Predicated region
  $region18: #{tpu_custom_call.1} parent=0 // pred_check
    _
  $region19: #{tpu_custom_call.1} parent=0 // pred_check_branch
    %272 = sbr.rel (0) target = $region21
  $region20: #{tpu_custom_call.1} parent=0 // pred_region
    _
  $region21: #{tpu_custom_call.1} parent=0 // pred_fallthru
    _
  // Predicated region
  $region22: #{tpu_custom_call.1} parent=0 // pred_check
    _
  $region23: #{tpu_custom_call.1} parent=0 // pred_check_branch
    %274 = sbr.rel (0) target = $region25
  $region24: #{tpu_custom_call.1} parent=0 // pred_region
    _
  $region25: #{tpu_custom_call.1} parent=0 // pred_fallthru
    _
  // Predicated region
  $region26: #{tpu_custom_call.1} parent=0 // pred_check
    _
  $region27: #{tpu_custom_call.1} parent=0 // pred_check_branch
    %276 = sbr.rel (0) target = $region29
  $region28: #{tpu_custom_call.1} parent=0 // pred_region
    _
  $region29: #{tpu_custom_call.1} parent=0 // pred_fallthru
    _

</llo_original>
